<compile_context>
chip_gen: v6e
topology: v6e:2x2x1
jax: 0.10.0
libtpu: 0.0.40
codegen_flags: <defaults>
</compile_context>

<pallas_src>
import jax
import jax.numpy as jnp
import numpy as np
from jax.experimental import pallas as pl
from jax.experimental.pallas import tpu as pltpu


def _softplus(x):
    # Exact, branch-free, numerically stable softplus (matches torch Softplus(beta=1,
    # threshold=20) to < 3e-9 everywhere).
    return jnp.maximum(x, 0.0) + jnp.log(1.0 + jnp.exp(-jnp.abs(x)))


def _make_edge_kernel(num_nodes, e_tile, n_per_core, num_edges):
    """Edge MLP + scatter-mean accumulation + edge-readout running sum."""

    def kernel(xe_ref, dst_ref, invdeg_ref, w1_ref, b1_ref, w2_ref, b2_ref,
               e_out_ref, ve_ref, ue_ref):
        c = pl.program_id(0)          # core / parallel slab
        t = pl.program_id(1)          # edge-tile index within the slab

        @pl.when(t == 0)
        def _init():
            ve_ref[...] = jnp.zeros_like(ve_ref)
            ue_ref[...] = jnp.zeros_like(ue_ref)

        # ---- edge update: edge_func([vi, vj, e, u]); u-term pre-folded into b1 ----
        h = _softplus(jnp.dot(xe_ref[...], w1_ref[...],
                              preferred_element_type=jnp.float32) + b1_ref[...])
        e_new = _softplus(jnp.dot(h, w2_ref[...],
                                  preferred_element_type=jnp.float32) + b2_ref[...])
        e_out_ref[...] = e_new

        # ---- scatter-mean: scaled one-hot (N, e_tile) built in-register ----
        # 1/deg is already folded per edge; padded edges carry dst == N (never match).
        node_iota = jax.lax.broadcasted_iota(jnp.int32, (num_nodes, e_tile), 0)
        scat_t = jnp.where(node_iota == dst_ref[...], invdeg_ref[...], 0.0)
        ve_ref[...] += jnp.dot(scat_t, e_new, preferred_element_type=jnp.float32)

        # ---- edge-readout running sum; mask padded tail edges in-register ----
        e_base = (c * n_per_core + t) * e_tile
        eidx = e_base + jax.lax.broadcasted_iota(jnp.int32, (e_tile, 1), 0)
        valid = (eidx < num_edges).astype(jnp.float32)
        ue_ref[...] += jnp.sum(e_new * valid, axis=0, keepdims=True)

    return kernel


def _make_node_attr_kernel(inv_e, inv_n):
    """Node MLP + graph-attr MLP (runs once, after the edge loop)."""

    def kernel(v_ref, ve_ref, u_ref, ue_ref,
               w1nv_ref, w1ne_ref, b1n_ref, w2n_ref, b2n_ref,
               w1uu_ref, w1ue_ref, w1uv_ref, b1u_ref, w2u_ref, b2u_ref,
               v_out_ref, u_out_ref):
        # node update: node_func([v, ve, u]) (u-term pre-folded into b1n)
        h_n = _softplus(
            jnp.dot(v_ref[...], w1nv_ref[...], preferred_element_type=jnp.float32)
            + jnp.dot(ve_ref[...], w1ne_ref[...], preferred_element_type=jnp.float32)
            + b1n_ref[...])
        v_new = _softplus(jnp.dot(h_n, w2n_ref[...],
                                  preferred_element_type=jnp.float32) + b2n_ref[...])
        v_out_ref[...] = v_new

        # graph-attr update: attr_func([u, ue, uv])
        ue = ue_ref[...] * inv_e
        uv = jnp.sum(v_new, axis=0, keepdims=True) * inv_n
        h_u = _softplus(
            jnp.dot(u_ref[...], w1uu_ref[...], preferred_element_type=jnp.float32)
            + jnp.dot(ue, w1ue_ref[...], preferred_element_type=jnp.float32)
            + jnp.dot(uv, w1uv_ref[...], preferred_element_type=jnp.float32)
            + b1u_ref[...])
        u_out_ref[...] = _softplus(jnp.dot(h_u, w2u_ref[...],
                                           preferred_element_type=jnp.float32)
                                   + b2u_ref[...])

    return kernel


def megnet_graph_conv(src, dst, edge_feat, node_feat, graph_attr, params,
                      *, e_tile=512, num_cores=2):
    f32 = jnp.float32
    E, DE = edge_feat.shape
    N, DV = node_feat.shape
    DU = graph_attr.shape[1]
    H = params["w1e"].shape[1]
    DEO = params["w2e"].shape[1]
    DVO = params["w2n"].shape[1]
    DUO = params["w2u"].shape[1]
    Ke = 2 * DV + DE

    rup = lambda x, m=128: ((x + m - 1) // m) * m
    Kep, Hp = rup(Ke), rup(H)
    DEOp, DVOp, DUOp = rup(DEO), rup(DVO), rup(DUO)

    src = src.astype(jnp.int32)
    dst = dst.astype(jnp.int32)
    node_feat = node_feat.astype(f32)
    edge_feat = edge_feat.astype(f32)
    graph_attr = graph_attr.astype(f32)

    # ---------------- edge tiling (lane dim -> multiples of 128) ----------------
    e_tile = max(128, (int(e_tile) // 128) * 128)
    e_tile = min(e_tile, rup(E))
    n_tiles = pl.cdiv(E, e_tile)
    num_cores = max(1, min(int(num_cores), n_tiles))
    n_per_core = pl.cdiv(n_tiles, num_cores)
    E_pad = num_cores * n_per_core * e_tile
    pad = E_pad - E

    # ------------- graph-static precompute (plain XLA, outside kernels) -------------
    # Real gathers (not one-hot matmuls); pre-concatenated edge-MLP input slab.
    xe = jnp.concatenate([node_feat[src], node_feat[dst], edge_feat], axis=1)
    xe = jnp.pad(xe, ((0, pad), (0, Kep - Ke)))                        # (E_pad, Kep)

    deg = jnp.zeros((N,), f32).at[dst].add(1.0)
    inv_deg = (1.0 / jnp.maximum(deg, 1.0))[dst]                       # per-edge 1/deg
    dst_row = jnp.pad(dst, (0, pad), constant_values=N).reshape(1, E_pad)
    invdeg_row = jnp.pad(inv_deg, (0, pad)).reshape(1, E_pad)

    # Fold the broadcast graph-attr contribution of the edge/node MLPs into biases,
    # pre-split the concat weights, zero-pad to lane-aligned dims.
    w1e = params["w1e"].astype(f32)
    w1n = params["w1n"].astype(f32)
    w1u = params["w1u"].astype(f32)
    b1e_eff = params["b1e"].astype(f32) + graph_attr @ w1e[Ke:, :]
    b1n_eff = params["b1n"].astype(f32) + graph_attr @ w1n[DV + DEO:, :]

    def pad2(w, rows, cols):
        w = w.astype(f32)
        return jnp.pad(w, ((0, rows - w.shape[0]), (0, cols - w.shape[1])))

    w1e_x = pad2(w1e[:Ke, :], Kep, Hp)
    b1e_p = pad2(b1e_eff, 1, Hp)
    w2e_p = pad2(params["w2e"], Hp, DEOp)
    b2e_p = pad2(params["b2e"], 1, DEOp)

    w1n_v = pad2(w1n[:DV, :], DV, Hp)
    w1n_e = pad2(w1n[DV:DV + DEO, :], DEOp, Hp)     # zero rows kill padded e columns
    b1n_p = pad2(b1n_eff, 1, Hp)
    w2n_p = pad2(params["w2n"], Hp, DVOp)
    b2n_p = pad2(params["b2n"], 1, DVOp)

    w1u_u = pad2(w1u[:DU, :], DU, Hp)
    w1u_e = pad2(w1u[DU:DU + DEO, :], DEOp, Hp)
    w1u_v = pad2(w1u[DU + DEO:, :], DVOp, Hp)
    b1u_p = pad2(params["b1u"], 1, Hp)
    w2u_p = pad2(params["w2u"], Hp, DUOp)
    b2u_p = pad2(params["b2u"], 1, DUOp)

    # ------------------------------ edge-loop kernel ------------------------------
    edge_args = (xe, dst_row, invdeg_row, w1e_x, b1e_p, w2e_p, b2e_p)

    edge_blk = lambda width: pl.BlockSpec(
        (e_tile, width), lambda c, t: (c * n_per_core + t, 0))
    row_blk = lambda: pl.BlockSpec(
        (1, e_tile), lambda c, t: (0, c * n_per_core + t))
    const_blk = lambda a: pl.BlockSpec(a.shape, lambda c, t: (0, 0))

    edge_in_specs = [edge_blk(Kep), row_blk(), row_blk()] + \
                    [const_blk(a) for a in edge_args[3:]]

    edge_out_specs = (
        pl.BlockSpec((e_tile, DEOp), lambda c, t: (c * n_per_core + t, 0)),
        pl.BlockSpec((None, N, DEOp), lambda c, t: (c, 0, 0)),   # per-core scatter sum
        pl.BlockSpec((None, 1, DEOp), lambda c, t: (c, 0, 0)),   # per-core readout sum
    )

    flops = (2 * E_pad * Kep * Hp + 2 * E_pad * Hp * DEOp + 2 * E_pad * N * DEOp)
    transcendentals = E_pad * (Hp + DEOp)
    bytes_accessed = (int(xe.size) * 4 + E_pad * 8 + E_pad * DEOp * 4
                      + num_cores * (N + 1) * DEOp * 4
                      + sum(int(a.size) * 4 for a in edge_args[3:]))

    e_out, ve_part, ue_part = pl.pallas_call(
        _make_edge_kernel(N, e_tile, n_per_core, E),
        out_shape=(jax.ShapeDtypeStruct((E_pad, DEOp), f32),
                   jax.ShapeDtypeStruct((num_cores, N, DEOp), f32),
                   jax.ShapeDtypeStruct((num_cores, 1, DEOp), f32)),
        grid_spec=pltpu.PrefetchScalarGridSpec(
            num_scalar_prefetch=0,
            grid=(num_cores, n_per_core),
            in_specs=edge_in_specs,
            out_specs=edge_out_specs),
        compiler_params=pltpu.CompilerParams(
            dimension_semantics=("parallel", "arbitrary"),
            vmem_limit_bytes=48 * 1024 * 1024),   # raised vs default; safe on v7x too
        cost_estimate=pl.CostEstimate(flops=flops,
                                      transcendentals=transcendentals,
                                      bytes_accessed=bytes_accessed),
    )(*edge_args)

    # Combine the tiny per-core partials outside the kernel.
    sum_ve = jnp.sum(ve_part, axis=0)     # (N, DEOp) — mean of incoming edge messages
    sum_ue = jnp.sum(ue_part, axis=0)     # (1, DEOp) — sum over valid edges

    # --------------------------- node + graph-attr kernel ---------------------------
    na_args = (node_feat, sum_ve, graph_attr, sum_ue,
               w1n_v, w1n_e, b1n_p, w2n_p, b2n_p,
               w1u_u, w1u_e, w1u_v, b1u_p, w2u_p, b2u_p)
    full = lambda a: pl.BlockSpec(a.shape, lambda i: (0, 0))

    v_out, u_out = pl.pallas_call(
        _make_node_attr_kernel(1.0 / float(E), 1.0 / float(N)),
        out_shape=(jax.ShapeDtypeStruct((N, DVOp), f32),
                   jax.ShapeDtypeStruct((1, DUOp), f32)),
        grid_spec=pltpu.PrefetchScalarGridSpec(
            num_scalar_prefetch=0,
            grid=(1,),
            in_specs=[full(a) for a in na_args],
            out_specs=(pl.BlockSpec((N, DVOp), lambda i: (0, 0)),
                       pl.BlockSpec((1, DUOp), lambda i: (0, 0)))),
        compiler_params=pltpu.CompilerParams(
            dimension_semantics=("arbitrary",)),
    )(*na_args)

    return e_out[:E, :DEO], v_out[:, :DVO], u_out[:, :DUO]


def reference(src, dst, edge_feat, node_feat, graph_attr, params):
    """Pure-JAX reference matching the PyTorch/DGL semantics."""
    E = edge_feat.shape[0]
    N = node_feat.shape[0]

    def mlp(x, w1, b1, w2, b2):
        h = _softplus(x @ w1 + b1)
        return _softplus(h @ w2 + b2)

    u_e = jnp.broadcast_to(graph_attr, (E, graph_attr.shape[1]))
    x_e = jnp.concatenate([node_feat[src], node_feat[dst], edge_feat, u_e], axis=1)
    e_new = mlp(x_e, params["w1e"], params["b1e"], params["w2e"], params["b2e"])

    sum_e = jnp.zeros((N, e_new.shape[1]), jnp.float32).at[dst].add(e_new)
    deg = jnp.zeros((N,), jnp.float32).at[dst].add(1.0)
    ve = sum_e / jnp.maximum(deg, 1.0)[:, None]
    u_n = jnp.broadcast_to(graph_attr, (N, graph_attr.shape[1]))
    x_n = jnp.concatenate([node_feat, ve, u_n], axis=1)
    v_new = mlp(x_n, params["w1n"], params["b1n"], params["w2n"], params["b2n"])

    ue = jnp.mean(e_new, axis=0, keepdims=True)
    uv = jnp.mean(v_new, axis=0, keepdims=True)
    x_u = jnp.concatenate([graph_attr, ue, uv], axis=1)
    u_new = mlp(x_u, params["w1u"], params["b1u"], params["w2u"], params["b2u"])
    return e_new, v_new, u_new


if __name__ == "__main__":
    # Small, deterministic problem (E deliberately not a multiple of the tile).
    N, E = 8, 19             # nodes, edges
    DV, DE, DU = 16, 16, 16  # node / edge / graph-attr feature dims
    H, OUT = 32, 32          # MLP hidden and output dims

    key = jax.random.PRNGKey(0)
    ks = jax.random.split(key, 20)

    def w(k, shape):
        return (0.1 * jax.random.normal(k, shape)).astype(jnp.float32)

    # edge_dims=[2*DV+DE+DU, H, OUT], node_dims=[DV+OUT+DU, H, OUT],
    # attr_dims=[DU+OUT+OUT, H, OUT]  (MLP with Softplus, activate_last=True)
    params = {
        "w1e": w(ks[0], (2 * DV + DE + DU, H)), "b1e": w(ks[1], (1, H)),
        "w2e": w(ks[2], (H, OUT)),              "b2e": w(ks[3], (1, OUT)),
        "w1n": w(ks[4], (DV + OUT + DU, H)),    "b1n": w(ks[5], (1, H)),
        "w2n": w(ks[6], (H, OUT)),              "b2n": w(ks[7], (1, OUT)),
        "w1u": w(ks[8], (DU + OUT + OUT, H)),   "b1u": w(ks[9], (1, H)),
        "w2u": w(ks[10], (H, OUT)),             "b2u": w(ks[11], (1, OUT)),
    }

    src = jax.random.randint(ks[12], (E,), 0, N, dtype=jnp.int32)
    dst = jax.random.randint(ks[13], (E,), 0, N, dtype=jnp.int32)
    edge_feat = w(ks[14], (E, DE))
    node_feat = w(ks[15], (N, DV))
    graph_attr = w(ks[16], (1, DU))

    e_out, v_out, u_out = megnet_graph_conv(src, dst, edge_feat, node_feat,
                                            graph_attr, params)
    jax.block_until_ready((e_out, v_out, u_out))

    e_ref, v_ref, u_ref = reference(src, dst, edge_feat, node_feat,
                                    graph_attr, params)
    np.testing.assert_allclose(np.asarray(e_out), np.asarray(e_ref), rtol=1e-5, atol=1e-5)
    np.testing.assert_allclose(np.asarray(v_out), np.asarray(v_ref), rtol=1e-5, atol=1e-5)
    np.testing.assert_allclose(np.asarray(u_out), np.asarray(u_ref), rtol=1e-5, atol=1e-5)

    print("KERNEL_OK")
</pallas_src>

<mosaic_0001>
module attributes {stable_mosaic.version = 11 : i64} {
  func.func @kernel(%arg0: i32, %arg1: i32, %arg2: memref<128x128xf32, #tpu.memory_space<vmem>>, %arg3: memref<1x128xi32, #tpu.memory_space<vmem>>, %arg4: memref<1x128xf32, #tpu.memory_space<vmem>>, %arg5: memref<128x128xf32, #tpu.memory_space<vmem>>, %arg6: memref<1x128xf32, #tpu.memory_space<vmem>>, %arg7: memref<128x128xf32, #tpu.memory_space<vmem>>, %arg8: memref<1x128xf32, #tpu.memory_space<vmem>>, %arg9: memref<128x128xf32, #tpu.memory_space<vmem>>, %arg10: memref<1x8x128xf32, #tpu.memory_space<vmem>>, %arg11: memref<1x1x128xf32, #tpu.memory_space<vmem>>) attributes {dimension_semantics = [#tpu.dimension_semantics<parallel>, #tpu.dimension_semantics<arbitrary>], iteration_bounds = array<i64: 1, 1>, scalar_prefetch = 0 : i64, scratch_operands = 0 : i64, tpu.core_type = #tpu.core_type<tc>, window_params = [{transform_indices = @transform_0, window_bounds = array<i64: 128, 128>}, {transform_indices = @transform_1, window_bounds = array<i64: 1, 128>}, {transform_indices = @transform_2, window_bounds = array<i64: 1, 128>}, {pipeline_mode = #tpu.pipeline_mode<synchronous>, transform_indices = @transform_3, window_bounds = array<i64: 128, 128>}, {pipeline_mode = #tpu.pipeline_mode<synchronous>, transform_indices = @transform_4, window_bounds = array<i64: 1, 128>}, {pipeline_mode = #tpu.pipeline_mode<synchronous>, transform_indices = @transform_5, window_bounds = array<i64: 128, 128>}, {pipeline_mode = #tpu.pipeline_mode<synchronous>, transform_indices = @transform_6, window_bounds = array<i64: 1, 128>}, {transform_indices = @transform_7, window_bounds = array<i64: 128, 128>}, {transform_indices = @transform_8, window_bounds = array<i64: 1, 8, 128>}, {transform_indices = @transform_9, window_bounds = array<i64: 1, 1, 128>}]} {
    %c0_i32 = arith.constant 0 : i32
    %0 = arith.cmpi eq, %arg1, %c0_i32 : i32
    %1 = arith.extui %0 : i1 to i32
    %c0_i32_0 = arith.constant 0 : i32
    %2 = arith.cmpi ne, %1, %c0_i32_0 : i32
    scf.if %2 {
      %cst_38 = arith.constant 0.000000e+00 : f32
      %71 = vector.broadcast %cst_38 : f32 to vector<8x128xf32>
      %c0_39 = arith.constant 0 : index
      %c0_40 = arith.constant 0 : index
      %c0_41 = arith.constant 0 : index
      %72 = vector.load %arg10[%c0_39, %c0_40, %c0_41] : memref<1x8x128xf32, #tpu.memory_space<vmem>>, vector<1x8x128xf32>
      %73 = vector.shape_cast %72 : vector<1x8x128xf32> to vector<8x128xf32>
      %74 = vector.shape_cast %71 : vector<8x128xf32> to vector<1x8x128xf32>
      tpu.vector_store %arg10[%c0_39, %c0_40, %c0_41], %74 {strides = array<i32>} : memref<1x8x128xf32, #tpu.memory_space<vmem>>, vector<1x8x128xf32>,
      %cst_42 = arith.constant 0.000000e+00 : f32
      %75 = vector.broadcast %cst_42 : f32 to vector<1x128xf32>
      %c0_43 = arith.constant 0 : index
      %c0_44 = arith.constant 0 : index
      %c0_45 = arith.constant 0 : index
      %76 = vector.load %arg11[%c0_43, %c0_44, %c0_45] : memref<1x1x128xf32, #tpu.memory_space<vmem>>, vector<1x1x128xf32>
      %77 = vector.shape_cast %76 : vector<1x1x128xf32> to vector<1x128xf32>
      %78 = vector.shape_cast %75 : vector<1x128xf32> to vector<1x1x128xf32>
      tpu.vector_store %arg11[%c0_43, %c0_44, %c0_45], %78 {strides = array<i32>} : memref<1x1x128xf32, #tpu.memory_space<vmem>>, vector<1x1x128xf32>,
    } else {
    }
    %c0 = arith.constant 0 : index
    %c0_1 = arith.constant 0 : index
    %3 = vector.load %arg2[%c0, %c0_1] : memref<128x128xf32, #tpu.memory_space<vmem>>, vector<128x128xf32>
    %c0_2 = arith.constant 0 : index
    %c0_3 = arith.constant 0 : index
    %4 = vector.load %arg5[%c0_2, %c0_3] : memref<128x128xf32, #tpu.memory_space<vmem>>, vector<128x128xf32>
    %cst = arith.constant dense<0.000000e+00> : vector<128x128xf32>
    %5 = tpu.matmul %3, %4, %cst {dimension_numbers = #tpu.dot_dimension_numbers<[1], [0], [0], [1], [0, 0, 1, 1], [], []>} : vector<128x128xf32>, vector<128x128xf32>, vector<128x128xf32> -> vector<128x128xf32>
    %c0_4 = arith.constant 0 : index
    %c0_5 = arith.constant 0 : index
    %6 = vector.load %arg6[%c0_4, %c0_5] : memref<1x128xf32, #tpu.memory_space<vmem>>, vector<1x128xf32>
    %7 = vector.broadcast %6 : vector<1x128xf32> to vector<128x128xf32>
    %8 = arith.addf %5, %7 : vector<128x128xf32>
    %cst_6 = arith.constant 0.000000e+00 : f32
    %9 = vector.broadcast %cst_6 : f32 to vector<128x128xf32>
    %10 = arith.maximumf %8, %9 : vector<128x128xf32>
    %11 = math.absf %8 : vector<128x128xf32>
    %cst_7 = arith.constant 0.000000e+00 : f32
    %12 = vector.broadcast %cst_7 : f32 to vector<128x128xf32>
    %13 = arith.subf %12, %11 : vector<128x128xf32>
    %14 = math.exp %13 : vector<128x128xf32>
    %cst_8 = arith.constant 1.000000e+00 : f32
    %15 = vector.broadcast %cst_8 : f32 to vector<128x128xf32>
    %16 = arith.addf %15, %14 : vector<128x128xf32>
    %17 = math.log %16 : vector<128x128xf32>
    %18 = arith.addf %10, %17 : vector<128x128xf32>
    %c0_9 = arith.constant 0 : index
    %c0_10 = arith.constant 0 : index
    %19 = vector.load %arg7[%c0_9, %c0_10] : memref<128x128xf32, #tpu.memory_space<vmem>>, vector<128x128xf32>
    %cst_11 = arith.constant dense<0.000000e+00> : vector<128x128xf32>
    %20 = tpu.matmul %18, %19, %cst_11 {dimension_numbers = #tpu.dot_dimension_numbers<[1], [0], [0], [1], [0, 0, 1, 1], [], []>} : vector<128x128xf32>, vector<128x128xf32>, vector<128x128xf32> -> vector<128x128xf32>
    %c0_12 = arith.constant 0 : index
    %c0_13 = arith.constant 0 : index
    %21 = vector.load %arg8[%c0_12, %c0_13] : memref<1x128xf32, #tpu.memory_space<vmem>>, vector<1x128xf32>
    %22 = vector.broadcast %21 : vector<1x128xf32> to vector<128x128xf32>
    %23 = arith.addf %20, %22 : vector<128x128xf32>
    %cst_14 = arith.constant 0.000000e+00 : f32
    %24 = vector.broadcast %cst_14 : f32 to vector<128x128xf32>
    %25 = arith.maximumf %23, %24 : vector<128x128xf32>
    %26 = math.absf %23 : vector<128x128xf32>
    %cst_15 = arith.constant 0.000000e+00 : f32
    %27 = vector.broadcast %cst_15 : f32 to vector<128x128xf32>
    %28 = arith.subf %27, %26 : vector<128x128xf32>
    %29 = math.exp %28 : vector<128x128xf32>
    %cst_16 = arith.constant 1.000000e+00 : f32
    %30 = vector.broadcast %cst_16 : f32 to vector<128x128xf32>
    %31 = arith.addf %30, %29 : vector<128x128xf32>
    %32 = math.log %31 : vector<128x128xf32>
    %33 = arith.addf %25, %32 : vector<128x128xf32>
    %c0_17 = arith.constant 0 : index
    %c0_18 = arith.constant 0 : index
    %34 = vector.load %arg9[%c0_17, %c0_18] : memref<128x128xf32, #tpu.memory_space<vmem>>, vector<128x128xf32>
    tpu.vector_store %arg9[%c0_17, %c0_18], %33 {strides = array<i32>} : memref<128x128xf32, #tpu.memory_space<vmem>>, vector<128x128xf32>,
    %35 = tpu.iota {dimensions = array<i32: 0>} : vector<8x128xi32>
    %c0_19 = arith.constant 0 : index
    %c0_20 = arith.constant 0 : index
    %36 = vector.load %arg3[%c0_19, %c0_20] : memref<1x128xi32, #tpu.memory_space<vmem>>, vector<1x128xi32>
    %37 = vector.broadcast %36 : vector<1x128xi32> to vector<8x128xi32>
    %38 = arith.cmpi eq, %35, %37 : vector<8x128xi32>
    %c0_21 = arith.constant 0 : index
    %c0_22 = arith.constant 0 : index
    %39 = vector.load %arg4[%c0_21, %c0_22] : memref<1x128xf32, #tpu.memory_space<vmem>>, vector<1x128xf32>
    %cst_23 = arith.constant 0.000000e+00 : f32
    %40 = vector.shape_cast %39 : vector<1x128xf32> to vector<1x128xf32>
    %41 = vector.broadcast %40 : vector<1x128xf32> to vector<8x128xf32>
    %42 = vector.broadcast %cst_23 : f32 to vector<8x128xf32>
    %43 = arith.select %38, %41, %42 : vector<8x128xi1>, vector<8x128xf32>
    %c0_24 = arith.constant 0 : index
    %c0_25 = arith.constant 0 : index
    %c0_26 = arith.constant 0 : index
    %44 = vector.load %arg10[%c0_24, %c0_25, %c0_26] : memref<1x8x128xf32, #tpu.memory_space<vmem>>, vector<1x8x128xf32>
    %45 = vector.shape_cast %44 : vector<1x8x128xf32> to vector<8x128xf32>
    %cst_27 = arith.constant dense<0.000000e+00> : vector<8x128xf32>
    %46 = tpu.matmul %43, %33, %cst_27 {dimension_numbers = #tpu.dot_dimension_numbers<[1], [0], [0], [1], [0, 0, 1, 1], [], []>} : vector<8x128xf32>, vector<128x128xf32>, vector<8x128xf32> -> vector<8x128xf32>
    %47 = arith.addf %45, %46 : vector<8x128xf32>
    %c0_28 = arith.constant 0 : index
    %c0_29 = arith.constant 0 : index
    %c0_30 = arith.constant 0 : index
    %48 = vector.load %arg10[%c0_28, %c0_29, %c0_30] : memref<1x8x128xf32, #tpu.memory_space<vmem>>, vector<1x8x128xf32>
    %49 = vector.shape_cast %48 : vector<1x8x128xf32> to vector<8x128xf32>
    %50 = vector.shape_cast %47 : vector<8x128xf32> to vector<1x8x128xf32>
    tpu.vector_store %arg10[%c0_28, %c0_29, %c0_30], %50 {strides = array<i32>} : memref<1x8x128xf32, #tpu.memory_space<vmem>>, vector<1x8x128xf32>,
    %c1_i32 = arith.constant 1 : i32
    %51 = arith.muli %arg0, %c1_i32 : i32
    %52 = arith.addi %51, %arg1 : i32
    %c128_i32 = arith.constant 128 : i32
    %53 = arith.muli %52, %c128_i32 : i32
    %54 = tpu.iota {dimensions = array<i32: 0>} : vector<128x1xi32>
    %55 = vector.broadcast %53 : i32 to vector<128x1xi32>
    %56 = arith.addi %55, %54 : vector<128x1xi32>
    %c19_i32 = arith.constant 19 : i32
    %57 = vector.broadcast %c19_i32 : i32 to vector<128x1xi32>
    %58 = arith.cmpi slt, %56, %57 : vector<128x1xi32>
    %59 = arith.extui %58 : vector<128x1xi1> to vector<128x1xi32>
    %60 = arith.sitofp %59 : vector<128x1xi32> to vector<128x1xf32>
    %c0_31 = arith.constant 0 : index
    %c0_32 = arith.constant 0 : index
    %c0_33 = arith.constant 0 : index
    %61 = vector.load %arg11[%c0_31, %c0_32, %c0_33] : memref<1x1x128xf32, #tpu.memory_space<vmem>>, vector<1x1x128xf32>
    %62 = vector.shape_cast %61 : vector<1x1x128xf32> to vector<1x128xf32>
    %63 = vector.broadcast %60 : vector<128x1xf32> to vector<128x128xf32>
    %64 = arith.mulf %33, %63 : vector<128x128xf32>
    %cst_34 = arith.constant dense<0.000000e+00> : vector<128xf32>
    %65 = vector.multi_reduction <add>, %64, %cst_34 [0] : vector<128x128xf32> to vector<128xf32>
    %66 = vector.shape_cast %65 : vector<128xf32> to vector<1x128xf32>
    %67 = arith.addf %62, %66 : vector<1x128xf32>
    %c0_35 = arith.constant 0 : index
    %c0_36 = arith.constant 0 : index
    %c0_37 = arith.constant 0 : index
    %68 = vector.load %arg11[%c0_35, %c0_36, %c0_37] : memref<1x1x128xf32, #tpu.memory_space<vmem>>, vector<1x1x128xf32>
    %69 = vector.shape_cast %68 : vector<1x1x128xf32> to vector<1x128xf32>
    %70 = vector.shape_cast %67 : vector<1x128xf32> to vector<1x1x128xf32>
    tpu.vector_store %arg11[%c0_35, %c0_36, %c0_37], %70 {strides = array<i32>} : memref<1x1x128xf32, #tpu.memory_space<vmem>>, vector<1x1x128xf32>,
    return
  }
  func.func @transform_0(%arg0: i32, %arg1: i32) -> (i32, i32) {
    %c1_i32 = arith.constant 1 : i32
    %0 = arith.muli %arg0, %c1_i32 : i32
    %1 = arith.addi %0, %arg1 : i32
    %c0_i32 = arith.constant 0 : i32
    %c0_i32_0 = arith.constant 0 : i32
    return %1, %c0_i32 : i32, i32
  }
  func.func @transform_1(%arg0: i32, %arg1: i32) -> (i32, i32) {
    %c1_i32 = arith.constant 1 : i32
    %0 = arith.muli %arg0, %c1_i32 : i32
    %1 = arith.addi %0, %arg1 : i32
    %c0_i32 = arith.constant 0 : i32
    %c0_i32_0 = arith.constant 0 : i32
    return %c0_i32, %1 : i32, i32
  }
  func.func @transform_2(%arg0: i32, %arg1: i32) -> (i32, i32) {
    %c1_i32 = arith.constant 1 : i32
    %0 = arith.muli %arg0, %c1_i32 : i32
    %1 = arith.addi %0, %arg1 : i32
    %c0_i32 = arith.constant 0 : i32
    %c0_i32_0 = arith.constant 0 : i32
    return %c0_i32, %1 : i32, i32
  }
  func.func @transform_3(%arg0: i32, %arg1: i32) -> (i32, i32) {
    %c0_i32 = arith.constant 0 : i32
    %c0_i32_0 = arith.constant 0 : i32
    %c0_i32_1 = arith.constant 0 : i32
    return %c0_i32, %c0_i32_0 : i32, i32
  }
  func.func @transform_4(%arg0: i32, %arg1: i32) -> (i32, i32) {
    %c0_i32 = arith.constant 0 : i32
    %c0_i32_0 = arith.constant 0 : i32
    %c0_i32_1 = arith.constant 0 : i32
    return %c0_i32, %c0_i32_0 : i32, i32
  }
  func.func @transform_5(%arg0: i32, %arg1: i32) -> (i32, i32) {
    %c0_i32 = arith.constant 0 : i32
    %c0_i32_0 = arith.constant 0 : i32
    %c0_i32_1 = arith.constant 0 : i32
    return %c0_i32, %c0_i32_0 : i32, i32
  }
  func.func @transform_6(%arg0: i32, %arg1: i32) -> (i32, i32) {
    %c0_i32 = arith.constant 0 : i32
    %c0_i32_0 = arith.constant 0 : i32
    %c0_i32_1 = arith.constant 0 : i32
    return %c0_i32, %c0_i32_0 : i32, i32
  }
  func.func @transform_7(%arg0: i32, %arg1: i32) -> (i32, i32) {
    %c1_i32 = arith.constant 1 : i32
    %0 = arith.muli %arg0, %c1_i32 : i32
    %1 = arith.addi %0, %arg1 : i32
    %c0_i32 = arith.constant 0 : i32
    %c0_i32_0 = arith.constant 0 : i32
    return %1, %c0_i32 : i32, i32
  }
  func.func @transform_8(%arg0: i32, %arg1: i32) -> (i32, i32, i32) {
    %c0_i32 = arith.constant 0 : i32
    %c0_i32_0 = arith.constant 0 : i32
    %c0_i32_1 = arith.constant 0 : i32
    return %arg0, %c0_i32, %c0_i32_0 : i32, i32, i32
  }
  func.func @transform_9(%arg0: i32, %arg1: i32) -> (i32, i32, i32) {
    %c0_i32 = arith.constant 0 : i32
    %c0_i32_0 = arith.constant 0 : i32
    %c0_i32_1 = arith.constant 0 : i32
    return %arg0, %c0_i32, %c0_i32_0 : i32, i32, i32
  }
}

</mosaic_0001>

<llo_original>
// kernel: tpu_custom_call.1
$region0: #{tpu_custom_call.1}
  #allocation0 [shape = 'u32[]', space=smem, size = 0x4, offset = 0x4, fixed_abs, tag = 'smem constant byte address 0x4 - core index']
  #allocation1 [shape = 'u32[144,128]{1,0:T(1,128)}', space=vmem, size = 0x12000, scoped, tag = 'internal scratch']
  %s0 = inlined_call_operand.hbm [shape: f32[128,128], index: 0, kind: input, shape index: {}]
  %s1 = inlined_call_operand.vmem [shape: s32[1,128], index: 1, kind: input, shape index: {}]
  %s2 = inlined_call_operand.vmem [shape: f32[1,128], index: 2, kind: input, shape index: {}]
  %s3 = inlined_call_operand.hbm [shape: f32[128,128], index: 3, kind: input, shape index: {}]
  %s4 = inlined_call_operand.vmem [shape: f32[1,128], index: 4, kind: input, shape index: {}]
  %s5 = inlined_call_operand.hbm [shape: f32[128,128], index: 5, kind: input, shape index: {}]
  %s6 = inlined_call_operand.vmem [shape: f32[1,128], index: 6, kind: input, shape index: {}]
  %s7 = inlined_call_operand.hbm [shape: f32[128,128], index: 7, kind: output, shape index: {0}]
  %s8 = inlined_call_operand.hbm [shape: f32[1,8,128], index: 8, kind: output, shape index: {1}]
  %s9 = inlined_call_operand.hbm [shape: f32[1,1,128], index: 9, kind: output, shape index: {2}]
  %10 = xla_tuple %s7, %s8, %s9
  %s11 = sld [smem:[#allocation0]]
  $region70: #{tpu_custom_call.1} parent=0
    _
  %s13 = ssub.s32 1, %s11
  %s14 = scalar_select 0, %s13, %s11
  $region1: #{tpu_custom_call.1} parent=0
    #allocation2 [shape = 'u8[65536]{0}', space=vmem, size = 0x10000, scoped, tag = 'input window, operand 0, single buffered']
    #allocation3 [shape = 's32[1]{0}', space=sflag, size = 0x4, scoped, tag = 'scoped memory for tpu_custom_call.1']
    #allocation4 [shape = 's32[1]{0}', space=sflag, size = 0x4, scoped, tag = 'scoped memory for tpu_custom_call.1']
    #allocation5 [shape = 'u8[65536]{0}', space=vmem, size = 0x10000, scoped, tag = 'input window, operand 3, single buffered']
    #allocation6 [shape = 's32[1]{0}', space=sflag, size = 0x4, scoped, tag = 'scoped memory for tpu_custom_call.1']
    #allocation7 [shape = 'u8[65536]{0}', space=vmem, size = 0x10000, scoped, tag = 'input window, operand 5, single buffered']
    #allocation8 [shape = 'u8[65536]{0}', space=vmem, size = 0x10000, scoped, tag = 'output window, operand 0, single buffered']
    #allocation9 [shape = 'u8[4096]{0}', space=vmem, size = 0x1000, scoped, tag = 'output window, operand 1, single buffered']
    #allocation10 [shape = 's32[1]{0}', space=sflag, size = 0x4, scoped, tag = 'scoped memory for tpu_custom_call.1']
    #allocation11 [shape = 'u8[512]{0}', space=vmem, size = 0x400, scoped, tag = 'output window, operand 2, single buffered']
    %15 = vsyncpa [#allocation3], 0
    %16 = vsyncpa [#allocation6], 0
    %17 = vsyncpa [#allocation4], 0
    %18 = vsyncpa [#allocation10], 0
    // Predicated region
    $region2: #{tpu_custom_call.1} parent=1 // pred_check
      _
    $region3: #{tpu_custom_call.1} parent=1 // pred_check_branch
      %20 = sbr.rel (0) target = $region5
    $region4: #{tpu_custom_call.1} parent=1 // pred_region
      %s21 = sadd.s32 0, 0
      %s22 = smul.u32 16, %s21
      %s24 = ssub.s32 2048, 2048
      %25 = vsyncadd [#allocation3], %s24
      %s26 = smul.addr %s22, 128
      %s27 = scalar_lea.hbm %s0, %s26
      %s28 = sshll.u32 [#allocation2], 4
      %s29 = int_to_ptr.vmem [resolvable:$true] %s28
      %34 = dma.hbm_to_vmem [thread:$0]  %s27, 2048, %s29, [#allocation3], 128, 128, 8
    $region5: #{tpu_custom_call.1} parent=1 // pred_fallthru
      _
    // Predicated region
    $region6: #{tpu_custom_call.1} parent=1 // pred_check
      _
    $region7: #{tpu_custom_call.1} parent=1 // pred_check_branch
      %36 = sbr.rel (0) target = $region9
    $region8: #{tpu_custom_call.1} parent=1 // pred_region
      %s37 = sadd.s32 0, 0
      %p38 = scmp.lt.s32.totalorder %s37, 0
      %s39 = scalar_select %p38, %s37, 0
      %s40 = scalar_lea.vmem %s1, %s39
      %s41 = sadd.s32 0, 0
    $region9: #{tpu_custom_call.1} parent=1 // pred_fallthru
      _
    // Predicated region
    $region10: #{tpu_custom_call.1} parent=1 // pred_check
      _
    $region11: #{tpu_custom_call.1} parent=1 // pred_check_branch
      %43 = sbr.rel (0) target = $region13
    $region12: #{tpu_custom_call.1} parent=1 // pred_region
      %s44 = sadd.s32 0, 0
      %p45 = scmp.lt.s32.totalorder %s44, 0
      %s46 = scalar_select %p45, %s44, 0
      %s47 = scalar_lea.vmem %s2, %s46
      %s48 = sadd.s32 0, 0
    $region13: #{tpu_custom_call.1} parent=1 // pred_fallthru
      _
    // Predicated region
    $region14: #{tpu_custom_call.1} parent=1 // pred_check
      _
    $region15: #{tpu_custom_call.1} parent=1 // pred_check_branch
      %50 = sbr.rel (0) target = $region17
    $region16: #{tpu_custom_call.1} parent=1 // pred_region
      %s52 = ssub.s32 2048, 2048
      %53 = vsyncadd [#allocation6], %s52
      %s54 = sshll.u32 [#allocation5], 4
      %s55 = int_to_ptr.vmem [resolvable:$true] %s54
      %60 = dma.hbm_to_vmem [thread:$0]  %s3, 2048, %s55, [#allocation6], 128, 128, 8
    $region17: #{tpu_custom_call.1} parent=1 // pred_fallthru
      _
    // Predicated region
    $region18: #{tpu_custom_call.1} parent=1 // pred_check
      _
    $region19: #{tpu_custom_call.1} parent=1 // pred_check_branch
      %62 = sbr.rel (0) target = $region21
    $region20: #{tpu_custom_call.1} parent=1 // pred_region
      _
    $region21: #{tpu_custom_call.1} parent=1 // pred_fallthru
      _
    // Predicated region
    $region22: #{tpu_custom_call.1} parent=1 // pred_check
      _
    $region23: #{tpu_custom_call.1} parent=1 // pred_check_branch
      %64 = sbr.rel (0) target = $region25
    $region24: #{tpu_custom_call.1} parent=1 // pred_region
      %s66 = ssub.s32 2048, 2048
      %67 = vsyncadd [#allocation6], %s66
      %s68 = sshll.u32 [#allocation7], 4
      %s69 = int_to_ptr.vmem [resolvable:$true] %s68
      %74 = dma.hbm_to_vmem [thread:$0]  %s5, 2048, %s69, [#allocation6], 128, 128, 8
    $region25: #{tpu_custom_call.1} parent=1 // pred_fallthru
      _
    // Predicated region
    $region26: #{tpu_custom_call.1} parent=1 // pred_check
      _
    $region27: #{tpu_custom_call.1} parent=1 // pred_check_branch
      %76 = sbr.rel (0) target = $region29
    $region28: #{tpu_custom_call.1} parent=1 // pred_region
      _
    $region29: #{tpu_custom_call.1} parent=1 // pred_fallthru
      _
    // Predicated region
    $region30: #{tpu_custom_call.1} parent=1 // pred_check
      _
    $region31: #{tpu_custom_call.1} parent=1 // pred_check_branch
      %78 = sbr.rel (0) target = $region33
    $region32: #{tpu_custom_call.1} parent=1 // pred_region
      %79 = dma.done [#allocation3], 2048
    $region33: #{tpu_custom_call.1} parent=1 // pred_fallthru
      _
    // Predicated region
    $region34: #{tpu_custom_call.1} parent=1 // pred_check
      _
    $region35: #{tpu_custom_call.1} parent=1 // pred_check_branch
      %81 = sbr.rel (0) target = $region37
    $region36: #{tpu_custom_call.1} parent=1 // pred_region
      %82 = dma.done [#allocation6], 2048
    $region37: #{tpu_custom_call.1} parent=1 // pred_fallthru
      _
    // Predicated region
    $region38: #{tpu_custom_call.1} parent=1 // pred_check
      _
    $region39: #{tpu_custom_call.1} parent=1 // pred_check_branch
      %84 = sbr.rel (0) target = $region41
    $region40: #{tpu_custom_call.1} parent=1 // pred_region
      %85 = dma.done [#allocation6], 2048
    $region41: #{tpu_custom_call.1} parent=1 // pred_fallthru
      _
    %s86 = sadd.s32 0, 0
    %p87 = scmp.lt.s32.totalorder %s86, 0
    %s88 = scalar_select %p87, %s86, 0
    %s89 = scalar_lea.vmem %s1, %s88
    %s90 = sadd.s32 0, 0
    %p91 = scmp.lt.s32.totalorder %s90, 0
    %s92 = scalar_select %p91, %s90, 0
    %s93 = scalar_lea.vmem %s2, %s92
    %s94 = sadd.s32 0, 0
    %s95 = smul.u32 16, %s94
    %s96 = sadd.s32 0, 0
    %p97 = scmp.lt.s32.totalorder %s96, 0
    %s98 = scalar_select %p97, %s96, 0
    %s99 = scalar_lea.vmem %s1, %s98
    %s100 = sadd.s32 0, 0
    %s101 = sadd.s32 0, 0
    %p102 = scmp.lt.s32.totalorder %s101, 0
    %s103 = scalar_select %p102, %s101, 0
    %s104 = scalar_lea.vmem %s2, %s103
    %s105 = sadd.s32 0, 0
    %s106 = sadd.s32 0, 0
    %s107 = smul.u32 16, %s106
    %p108 = scmp.eq.s32.totalorder 0, 0
    // Predicated region
    $region42: #{tpu_custom_call.1} parent=1 // pred_check
      %p109 = pneg %p108
    $region43: #{tpu_custom_call.1} parent=1 // pred_check_branch
      %111 = sbr.rel (%p109) target = $region45
    $region44: #{tpu_custom_call.1} parent=1 // pred_region
      %112 = vst [vmem:[#allocation9] sm:$0xff] 0.0
      %113 = vst [vmem:[#allocation11] sm:$0x1] 0.0
    $region45: #{tpu_custom_call.1} parent=1 // pred_fallthru
      _
    %v114 = vld [vmem:[#allocation2] sm:$0xff]
    %v115 = vld [vmem:[#allocation2 + $0x8] sm:$0xff]
    %v116 = vld [vmem:[#allocation2 + $0x10] sm:$0xff]
    %v117 = vld [vmem:[#allocation2 + $0x18] sm:$0xff]
    %v118 = vld [vmem:[#allocation2 + $0x20] sm:$0xff]
    %v119 = vld [vmem:[#allocation2 + $0x28] sm:$0xff]
    %v120 = vld [vmem:[#allocation2 + $0x30] sm:$0xff]
    %v121 = vld [vmem:[#allocation2 + $0x38] sm:$0xff]
    %v122 = vld [vmem:[#allocation2 + $0x40] sm:$0xff]
    %v123 = vld [vmem:[#allocation2 + $0x48] sm:$0xff]
    %v124 = vld [vmem:[#allocation2 + $0x50] sm:$0xff]
    %v125 = vld [vmem:[#allocation2 + $0x58] sm:$0xff]
    %v126 = vld [vmem:[#allocation2 + $0x60] sm:$0xff]
    %v127 = vld [vmem:[#allocation2 + $0x68] sm:$0xff]
    %v128 = vld [vmem:[#allocation2 + $0x70] sm:$0xff]
    %v129 = vld [vmem:[#allocation2 + $0x78] sm:$0xff]
    %v130 = vld [vmem:[#allocation5] sm:$0xff]
    %v131 = vld [vmem:[#allocation5 + $0x8] sm:$0xff]
    %v132 = vld [vmem:[#allocation5 + $0x10] sm:$0xff]
    %v133 = vld [vmem:[#allocation5 + $0x18] sm:$0xff]
    %v134 = vld [vmem:[#allocation5 + $0x20] sm:$0xff]
    %v135 = vld [vmem:[#allocation5 + $0x28] sm:$0xff]
    %v136 = vld [vmem:[#allocation5 + $0x30] sm:$0xff]
    %v137 = vld [vmem:[#allocation5 + $0x38] sm:$0xff]
    %v138 = vld [vmem:[#allocation5 + $0x40] sm:$0xff]
    %v139 = vld [vmem:[#allocation5 + $0x48] sm:$0xff]
    %v140 = vld [vmem:[#allocation5 + $0x50] sm:$0xff]
    %v141 = vld [vmem:[#allocation5 + $0x58] sm:$0xff]
    %v142 = vld [vmem:[#allocation5 + $0x60] sm:$0xff]
    %v143 = vld [vmem:[#allocation5 + $0x68] sm:$0xff]
    %v144 = vld [vmem:[#allocation5 + $0x70] sm:$0xff]
    %v145 = vld [vmem:[#allocation5 + $0x78] sm:$0xff]
    %v146 = vld [vmem:[%s4] sm:$0x1]
    %v148 = vlaneseq
    %v149 = vshrl.u32 %v148, 7
    %v150 = vsub.s32 0, %v149
    %v151 = vrot.slane %v146, %v150
    %153 = vmatprep.subr.mxu0 0.0
    %154 = vmatpush1.msra.mxu0 %v145
    %155 = vmatprep.subr.mxu0 0.0
    %156 = vmatpush1.msra.mxu0 %v144
    %157 = vmatprep.subr.mxu0 0.0
    %158 = vmatpush1.msra.mxu0 %v143
    %159 = vmatprep.subr.mxu0 0.0
    %160 = vmatpush1.msra.mxu0 %v142
    %161 = vmatprep.subr.mxu0 0.0
    %162 = vmatpush1.msra.mxu0 %v141
    %163 = vmatprep.subr.mxu0 0.0
    %164 = vmatpush1.msra.mxu0 %v140
    %165 = vmatprep.subr.mxu0 0.0
    %166 = vmatpush1.msra.mxu0 %v139
    %167 = vmatprep.subr.mxu0 0.0
    %168 = vmatpush1.msra.mxu0 %v138
    %169 = vmatprep.subr.mxu0 0.0
    %170 = vmatpush1.msra.mxu0 %v137
    %171 = vmatprep.subr.mxu0 0.0
    %172 = vmatpush1.msra.mxu0 %v136
    %173 = vmatprep.subr.mxu0 0.0
    %174 = vmatpush1.msra.mxu0 %v135
    %175 = vmatprep.subr.mxu0 0.0
    %176 = vmatpush1.msra.mxu0 %v134
    %177 = vmatprep.subr.mxu0 0.0
    %178 = vmatpush1.msra.mxu0 %v133
    %179 = vmatprep.subr.mxu0 0.0
    %180 = vmatpush1.msra.mxu0 %v132
    %181 = vmatprep.subr.mxu0 0.0
    %182 = vmatpush1.msra.mxu0 %v131
    %183 = vmatprep.subr.mxu0 0.0
    %184 = vmatpush1.msra.mxu0 %v130
    %185 = vmatprep.subr.mxu0 0.0
    %186 = vmatpush2.msra.mxu0 0.0
    %187 = vmatprep.subr.mxu0 0.0
    %188 = vmatpush2.msra.mxu0 0.0
    %189 = vmatprep.subr.mxu0 0.0
    %190 = vmatpush2.msra.mxu0 0.0
    %191 = vmatprep.subr.mxu0 0.0
    %192 = vmatpush2.msra.mxu0 0.0
    %193 = vmatprep.subr.mxu0 0.0
    %194 = vmatpush2.msra.mxu0 0.0
    %195 = vmatprep.subr.mxu0 0.0
    %196 = vmatpush2.msra.mxu0 0.0
    %197 = vmatprep.subr.mxu0 0.0
    %198 = vmatpush2.msra.mxu0 0.0
    %199 = vmatprep.subr.mxu0 0.0
    %200 = vmatpush2.msra.mxu0 0.0
    %201 = vmatprep.subr.mxu0 0.0
    %202 = vmatpush2.msra.mxu0 0.0
    %203 = vmatprep.subr.mxu0 0.0
    %204 = vmatpush2.msra.mxu0 0.0
    %205 = vmatprep.subr.mxu0 0.0
    %206 = vmatpush2.msra.mxu0 0.0
    %207 = vmatprep.subr.mxu0 0.0
    %208 = vmatpush2.msra.mxu0 0.0
    %209 = vmatprep.subr.mxu0 0.0
    %210 = vmatpush2.msra.mxu0 0.0
    %211 = vmatprep.subr.mxu0 0.0
    %212 = vmatpush2.msra.mxu0 0.0
    %213 = vmatprep.subr.mxu0 0.0
    %214 = vmatpush2.msra.mxu0 0.0
    %215 = vmatprep.subr.mxu0 0.0
    %216 = vmatpush2.msra.mxu0 0.0
    %217 = vmatprep.mubr.f32.mxu0 0.0
    %218 = vmatmul.mubr.f32.gmra.mxu0 %v114
    %v219 = vpop.f32.mrf.mxu0
    %v220 = vadd.f32 %v151, %v219
    %v221 = vpop.f32.mrf.mxu0
    %222 = vmatprep.mubr.f32.mxu0 0.0
    %223 = vmatmul.mubr.f32.gmra.mxu0 %v115
    %v224 = vpop.f32.mrf.mxu0
    %v225 = vadd.f32 %v151, %v224
    %v226 = vpop.f32.mrf.mxu0
    %227 = vmatprep.mubr.f32.mxu0 0.0
    %228 = vmatmul.mubr.f32.gmra.mxu0 %v116
    %v229 = vpop.f32.mrf.mxu0
    %v230 = vadd.f32 %v151, %v229
    %v231 = vpop.f32.mrf.mxu0
    %232 = vmatprep.mubr.f32.mxu0 0.0
    %233 = vmatmul.mubr.f32.gmra.mxu0 %v117
    %v234 = vpop.f32.mrf.mxu0
    %v235 = vadd.f32 %v151, %v234
    %v236 = vpop.f32.mrf.mxu0
    %237 = vmatprep.mubr.f32.mxu0 0.0
    %238 = vmatmul.mubr.f32.gmra.mxu0 %v118
    %v239 = vpop.f32.mrf.mxu0
    %v240 = vadd.f32 %v151, %v239
    %v241 = vpop.f32.mrf.mxu0
    %242 = vmatprep.mubr.f32.mxu0 0.0
    %243 = vmatmul.mubr.f32.gmra.mxu0 %v119
    %v244 = vpop.f32.mrf.mxu0
    %v245 = vadd.f32 %v151, %v244
    %v246 = vpop.f32.mrf.mxu0
    %247 = vmatprep.mubr.f32.mxu0 0.0
    %248 = vmatmul.mubr.f32.gmra.mxu0 %v120
    %v249 = vpop.f32.mrf.mxu0
    %v250 = vadd.f32 %v151, %v249
    %v251 = vpop.f32.mrf.mxu0
    %252 = vmatprep.mubr.f32.mxu0 0.0
    %253 = vmatmul.mubr.f32.gmra.mxu0 %v121
    %v254 = vpop.f32.mrf.mxu0
    %v255 = vadd.f32 %v151, %v254
    %v256 = vpop.f32.mrf.mxu0
    %257 = vmatprep.mubr.f32.mxu0 0.0
    %258 = vmatmul.mubr.f32.gmra.mxu0 %v122
    %v259 = vpop.f32.mrf.mxu0
    %v260 = vadd.f32 %v151, %v259
    %v261 = vpop.f32.mrf.mxu0
    %262 = vmatprep.mubr.f32.mxu0 0.0
    %263 = vmatmul.mubr.f32.gmra.mxu0 %v123
    %v264 = vpop.f32.mrf.mxu0
    %v265 = vadd.f32 %v151, %v264
    %v266 = vpop.f32.mrf.mxu0
    %267 = vmatprep.mubr.f32.mxu0 0.0
    %268 = vmatmul.mubr.f32.gmra.mxu0 %v124
    %v269 = vpop.f32.mrf.mxu0
    %v270 = vadd.f32 %v151, %v269
    %v271 = vpop.f32.mrf.mxu0
    %272 = vmatprep.mubr.f32.mxu0 0.0
    %273 = vmatmul.mubr.f32.gmra.mxu0 %v125
    %v274 = vpop.f32.mrf.mxu0
    %v275 = vadd.f32 %v151, %v274
    %v276 = vpop.f32.mrf.mxu0
    %277 = vmatprep.mubr.f32.mxu0 0.0
    %278 = vmatmul.mubr.f32.gmra.mxu0 %v126
    %v279 = vpop.f32.mrf.mxu0
    %v280 = vadd.f32 %v151, %v279
    %v281 = vpop.f32.mrf.mxu0
    %282 = vmatprep.mubr.f32.mxu0 0.0
    %283 = vmatmul.mubr.f32.gmra.mxu0 %v127
    %v284 = vpop.f32.mrf.mxu0
    %v285 = vadd.f32 %v151, %v284
    %v286 = vpop.f32.mrf.mxu0
    %287 = vmatprep.mubr.f32.mxu0 0.0
    %288 = vmatmul.mubr.f32.gmra.mxu0 %v128
    %v289 = vpop.f32.mrf.mxu0
    %v290 = vadd.f32 %v151, %v289
    %v291 = vpop.f32.mrf.mxu0
    %292 = vmatprep.mubr.f32.mxu0 0.0
    %293 = vmatmul.mubr.f32.gmra.mxu0 %v129
    %v294 = vpop.f32.mrf.mxu0
    %v295 = vadd.f32 %v151, %v294
    %v296 = vpop.f32.mrf.mxu0
    %297 = vdwg.mxu0
    %v298 = vmax.f32 %v220, 0.0
    %v299 = vmax.f32 %v225, 0.0
    %v300 = vmax.f32 %v230, 0.0
    %v301 = vmax.f32 %v235, 0.0
    %v302 = vmax.f32 %v240, 0.0
    %v303 = vmax.f32 %v245, 0.0
    %v304 = vmax.f32 %v250, 0.0
    %v305 = vmax.f32 %v255, 0.0
    %v306 = vmax.f32 %v260, 0.0
    %v307 = vmax.f32 %v265, 0.0
    %v308 = vmax.f32 %v270, 0.0
    %v309 = vmax.f32 %v275, 0.0
    %v310 = vmax.f32 %v280, 0.0
    %v311 = vmax.f32 %v285, 0.0
    %v312 = vmax.f32 %v290, 0.0
    %v313 = vmax.f32 %v295, 0.0
    %v314 = vand.u32 2147483647, %v220
    %v315 = vand.u32 2147483647, %v225
    %v316 = vand.u32 2147483647, %v230
    %v317 = vand.u32 2147483647, %v235
    %v318 = vand.u32 2147483647, %v240
    %v319 = vand.u32 2147483647, %v245
    %v320 = vand.u32 2147483647, %v250
    %v321 = vand.u32 2147483647, %v255
    %v322 = vand.u32 2147483647, %v260
    %v323 = vand.u32 2147483647, %v265
    %v324 = vand.u32 2147483647, %v270
    %v325 = vand.u32 2147483647, %v275
    %v326 = vand.u32 2147483647, %v280
    %v327 = vand.u32 2147483647, %v285
    %v328 = vand.u32 2147483647, %v290
    %v329 = vand.u32 2147483647, %v295
    %v330 = vsub.f32 0.0, %v314
    %v331 = vsub.f32 0.0, %v315
    %v332 = vsub.f32 0.0, %v316
    %v333 = vsub.f32 0.0, %v317
    %v334 = vsub.f32 0.0, %v318
    %v335 = vsub.f32 0.0, %v319
    %v336 = vsub.f32 0.0, %v320
    %v337 = vsub.f32 0.0, %v321
    %v338 = vsub.f32 0.0, %v322
    %v339 = vsub.f32 0.0, %v323
    %v340 = vsub.f32 0.0, %v324
    %v341 = vsub.f32 0.0, %v325
    %v342 = vsub.f32 0.0, %v326
    %v343 = vsub.f32 0.0, %v327
    %v344 = vsub.f32 0.0, %v328
    %v345 = vsub.f32 0.0, %v329
    %v346 = vmul.f32 %v330, 1.442695
    %v347 = vpow.pop %v346
    %v348 = vmul.f32 %v331, 1.442695
    %v349 = vpow.pop %v348
    %v350 = vmul.f32 %v332, 1.442695
    %v351 = vpow.pop %v350
    %v352 = vmul.f32 %v333, 1.442695
    %v353 = vpow.pop %v352
    %v354 = vmul.f32 %v334, 1.442695
    %v355 = vpow.pop %v354
    %v356 = vmul.f32 %v335, 1.442695
    %v357 = vpow.pop %v356
    %v358 = vmul.f32 %v336, 1.442695
    %v359 = vpow.pop %v358
    %v360 = vmul.f32 %v337, 1.442695
    %v361 = vpow.pop %v360
    %v362 = vmul.f32 %v338, 1.442695
    %v363 = vpow.pop %v362
    %v364 = vmul.f32 %v339, 1.442695
    %v365 = vpow.pop %v364
    %v366 = vmul.f32 %v340, 1.442695
    %v367 = vpow.pop %v366
    %v368 = vmul.f32 %v341, 1.442695
    %v369 = vpow.pop %v368
    %v370 = vmul.f32 %v342, 1.442695
    %v371 = vpow.pop %v370
    %v372 = vmul.f32 %v343, 1.442695
    %v373 = vpow.pop %v372
    %v374 = vmul.f32 %v344, 1.442695
    %v375 = vpow.pop %v374
    %v376 = vmul.f32 %v345, 1.442695
    %v377 = vpow.pop %v376
    %v378 = vadd.f32 %v347, 1.0
    %v379 = vadd.f32 %v349, 1.0
    %v380 = vadd.f32 %v351, 1.0
    %v381 = vadd.f32 %v353, 1.0
    %v382 = vadd.f32 %v355, 1.0
    %v383 = vadd.f32 %v357, 1.0
    %v384 = vadd.f32 %v359, 1.0
    %v385 = vadd.f32 %v361, 1.0
    %v386 = vadd.f32 %v363, 1.0
    %v387 = vadd.f32 %v365, 1.0
    %v388 = vadd.f32 %v367, 1.0
    %v389 = vadd.f32 %v369, 1.0
    %v390 = vadd.f32 %v371, 1.0
    %v391 = vadd.f32 %v373, 1.0
    %v392 = vadd.f32 %v375, 1.0
    %v393 = vadd.f32 %v377, 1.0
    %v394 = vlog2.pop %v378
    %v395 = vmul.f32 %v394, 0.6931472
    %v396 = vlog2.pop %v379
    %v397 = vmul.f32 %v396, 0.6931472
    %v398 = vlog2.pop %v380
    %v399 = vmul.f32 %v398, 0.6931472
    %v400 = vlog2.pop %v381
    %v401 = vmul.f32 %v400, 0.6931472
    %v402 = vlog2.pop %v382
    %v403 = vmul.f32 %v402, 0.6931472
    %v404 = vlog2.pop %v383
    %v405 = vmul.f32 %v404, 0.6931472
    %v406 = vlog2.pop %v384
    %v407 = vmul.f32 %v406, 0.6931472
    %v408 = vlog2.pop %v385
    %v409 = vmul.f32 %v408, 0.6931472
    %v410 = vlog2.pop %v386
    %v411 = vmul.f32 %v410, 0.6931472
    %v412 = vlog2.pop %v387
    %v413 = vmul.f32 %v412, 0.6931472
    %v414 = vlog2.pop %v388
    %v415 = vmul.f32 %v414, 0.6931472
    %v416 = vlog2.pop %v389
    %v417 = vmul.f32 %v416, 0.6931472
    %v418 = vlog2.pop %v390
    %v419 = vmul.f32 %v418, 0.6931472
    %v420 = vlog2.pop %v391
    %v421 = vmul.f32 %v420, 0.6931472
    %v422 = vlog2.pop %v392
    %v423 = vmul.f32 %v422, 0.6931472
    %v424 = vlog2.pop %v393
    %v425 = vmul.f32 %v424, 0.6931472
    %v426 = vadd.f32 %v298, %v395
    %v427 = vadd.f32 %v299, %v397
    %v428 = vadd.f32 %v300, %v399
    %v429 = vadd.f32 %v301, %v401
    %v430 = vadd.f32 %v302, %v403
    %v431 = vadd.f32 %v303, %v405
    %v432 = vadd.f32 %v304, %v407
    %v433 = vadd.f32 %v305, %v409
    %v434 = vadd.f32 %v306, %v411
    %v435 = vadd.f32 %v307, %v413
    %v436 = vadd.f32 %v308, %v415
    %v437 = vadd.f32 %v309, %v417
    %v438 = vadd.f32 %v310, %v419
    %v439 = vadd.f32 %v311, %v421
    %v440 = vadd.f32 %v312, %v423
    %v441 = vadd.f32 %v313, %v425
    %v442 = vld [vmem:[#allocation7] sm:$0xff]
    %v443 = vld [vmem:[#allocation7 + $0x8] sm:$0xff]
    %v444 = vld [vmem:[#allocation7 + $0x10] sm:$0xff]
    %v445 = vld [vmem:[#allocation7 + $0x18] sm:$0xff]
    %v446 = vld [vmem:[#allocation7 + $0x20] sm:$0xff]
    %v447 = vld [vmem:[#allocation7 + $0x28] sm:$0xff]
    %v448 = vld [vmem:[#allocation7 + $0x30] sm:$0xff]
    %v449 = vld [vmem:[#allocation7 + $0x38] sm:$0xff]
    %v450 = vld [vmem:[#allocation7 + $0x40] sm:$0xff]
    %v451 = vld [vmem:[#allocation7 + $0x48] sm:$0xff]
    %v452 = vld [vmem:[#allocation7 + $0x50] sm:$0xff]
    %v453 = vld [vmem:[#allocation7 + $0x58] sm:$0xff]
    %v454 = vld [vmem:[#allocation7 + $0x60] sm:$0xff]
    %v455 = vld [vmem:[#allocation7 + $0x68] sm:$0xff]
    %v456 = vld [vmem:[#allocation7 + $0x70] sm:$0xff]
    %v457 = vld [vmem:[#allocation7 + $0x78] sm:$0xff]
    %v458 = vld [vmem:[%s6] sm:$0x1]
    %v460 = vlaneseq
    %v461 = vshrl.u32 %v460, 7
    %v462 = vsub.s32 0, %v461
    %v463 = vrot.slane %v458, %v462
    %465 = vmatprep.subr.mxu0 0.0
    %466 = vmatpush1.msra.mxu0 %v457
    %467 = vmatprep.subr.mxu0 0.0
    %468 = vmatpush1.msra.mxu0 %v456
    %469 = vmatprep.subr.mxu0 0.0
    %470 = vmatpush1.msra.mxu0 %v455
    %471 = vmatprep.subr.mxu0 0.0
    %472 = vmatpush1.msra.mxu0 %v454
    %473 = vmatprep.subr.mxu0 0.0
    %474 = vmatpush1.msra.mxu0 %v453
    %475 = vmatprep.subr.mxu0 0.0
    %476 = vmatpush1.msra.mxu0 %v452
    %477 = vmatprep.subr.mxu0 0.0
    %478 = vmatpush1.msra.mxu0 %v451
    %479 = vmatprep.subr.mxu0 0.0
    %480 = vmatpush1.msra.mxu0 %v450
    %481 = vmatprep.subr.mxu0 0.0
    %482 = vmatpush1.msra.mxu0 %v449
    %483 = vmatprep.subr.mxu0 0.0
    %484 = vmatpush1.msra.mxu0 %v448
    %485 = vmatprep.subr.mxu0 0.0
    %486 = vmatpush1.msra.mxu0 %v447
    %487 = vmatprep.subr.mxu0 0.0
    %488 = vmatpush1.msra.mxu0 %v446
    %489 = vmatprep.subr.mxu0 0.0
    %490 = vmatpush1.msra.mxu0 %v445
    %491 = vmatprep.subr.mxu0 0.0
    %492 = vmatpush1.msra.mxu0 %v444
    %493 = vmatprep.subr.mxu0 0.0
    %494 = vmatpush1.msra.mxu0 %v443
    %495 = vmatprep.subr.mxu0 0.0
    %496 = vmatpush1.msra.mxu0 %v442
    %497 = vmatprep.subr.mxu0 0.0
    %498 = vmatpush2.msra.mxu0 0.0
    %499 = vmatprep.subr.mxu0 0.0
    %500 = vmatpush2.msra.mxu0 0.0
    %501 = vmatprep.subr.mxu0 0.0
    %502 = vmatpush2.msra.mxu0 0.0
    %503 = vmatprep.subr.mxu0 0.0
    %504 = vmatpush2.msra.mxu0 0.0
    %505 = vmatprep.subr.mxu0 0.0
    %506 = vmatpush2.msra.mxu0 0.0
    %507 = vmatprep.subr.mxu0 0.0
    %508 = vmatpush2.msra.mxu0 0.0
    %509 = vmatprep.subr.mxu0 0.0
    %510 = vmatpush2.msra.mxu0 0.0
    %511 = vmatprep.subr.mxu0 0.0
    %512 = vmatpush2.msra.mxu0 0.0
    %513 = vmatprep.subr.mxu0 0.0
    %514 = vmatpush2.msra.mxu0 0.0
    %515 = vmatprep.subr.mxu0 0.0
    %516 = vmatpush2.msra.mxu0 0.0
    %517 = vmatprep.subr.mxu0 0.0
    %518 = vmatpush2.msra.mxu0 0.0
    %519 = vmatprep.subr.mxu0 0.0
    %520 = vmatpush2.msra.mxu0 0.0
    %521 = vmatprep.subr.mxu0 0.0
    %522 = vmatpush2.msra.mxu0 0.0
    %523 = vmatprep.subr.mxu0 0.0
    %524 = vmatpush2.msra.mxu0 0.0
    %525 = vmatprep.subr.mxu0 0.0
    %526 = vmatpush2.msra.mxu0 0.0
    %527 = vmatprep.subr.mxu0 0.0
    %528 = vmatpush2.msra.mxu0 0.0
    %529 = vmatprep.mubr.f32.mxu0 0.0
    %530 = vmatmul.mubr.f32.gmra.mxu0 %v426
    %v531 = vpop.f32.mrf.mxu0
    %v532 = vadd.f32 %v463, %v531
    %v533 = vpop.f32.mrf.mxu0
    %534 = vmatprep.mubr.f32.mxu0 0.0
    %535 = vmatmul.mubr.f32.gmra.mxu0 %v427
    %v536 = vpop.f32.mrf.mxu0
    %v537 = vadd.f32 %v463, %v536
    %v538 = vpop.f32.mrf.mxu0
    %539 = vmatprep.mubr.f32.mxu0 0.0
    %540 = vmatmul.mubr.f32.gmra.mxu0 %v428
    %v541 = vpop.f32.mrf.mxu0
    %v542 = vadd.f32 %v463, %v541
    %v543 = vpop.f32.mrf.mxu0
    %544 = vmatprep.mubr.f32.mxu0 0.0
    %545 = vmatmul.mubr.f32.gmra.mxu0 %v429
    %v546 = vpop.f32.mrf.mxu0
    %v547 = vadd.f32 %v463, %v546
    %v548 = vpop.f32.mrf.mxu0
    %549 = vmatprep.mubr.f32.mxu0 0.0
    %550 = vmatmul.mubr.f32.gmra.mxu0 %v430
    %v551 = vpop.f32.mrf.mxu0
    %v552 = vadd.f32 %v463, %v551
    %v553 = vpop.f32.mrf.mxu0
    %554 = vmatprep.mubr.f32.mxu0 0.0
    %555 = vmatmul.mubr.f32.gmra.mxu0 %v431
    %v556 = vpop.f32.mrf.mxu0
    %v557 = vadd.f32 %v463, %v556
    %v558 = vpop.f32.mrf.mxu0
    %559 = vmatprep.mubr.f32.mxu0 0.0
    %560 = vmatmul.mubr.f32.gmra.mxu0 %v432
    %v561 = vpop.f32.mrf.mxu0
    %v562 = vadd.f32 %v463, %v561
    %v563 = vpop.f32.mrf.mxu0
    %564 = vmatprep.mubr.f32.mxu0 0.0
    %565 = vmatmul.mubr.f32.gmra.mxu0 %v433
    %v566 = vpop.f32.mrf.mxu0
    %v567 = vadd.f32 %v463, %v566
    %v568 = vpop.f32.mrf.mxu0
    %569 = vmatprep.mubr.f32.mxu0 0.0
    %570 = vmatmul.mubr.f32.gmra.mxu0 %v434
    %v571 = vpop.f32.mrf.mxu0
    %v572 = vadd.f32 %v463, %v571
    %v573 = vpop.f32.mrf.mxu0
    %574 = vmatprep.mubr.f32.mxu0 0.0
    %575 = vmatmul.mubr.f32.gmra.mxu0 %v435
    %v576 = vpop.f32.mrf.mxu0
    %v577 = vadd.f32 %v463, %v576
    %v578 = vpop.f32.mrf.mxu0
    %579 = vmatprep.mubr.f32.mxu0 0.0
    %580 = vmatmul.mubr.f32.gmra.mxu0 %v436
    %v581 = vpop.f32.mrf.mxu0
    %v582 = vadd.f32 %v463, %v581
    %v583 = vpop.f32.mrf.mxu0
    %584 = vmatprep.mubr.f32.mxu0 0.0
    %585 = vmatmul.mubr.f32.gmra.mxu0 %v437
    %v586 = vpop.f32.mrf.mxu0
    %v587 = vadd.f32 %v463, %v586
    %v588 = vpop.f32.mrf.mxu0
    %589 = vmatprep.mubr.f32.mxu0 0.0
    %590 = vmatmul.mubr.f32.gmra.mxu0 %v438
    %v591 = vpop.f32.mrf.mxu0
    %v592 = vadd.f32 %v463, %v591
    %v593 = vpop.f32.mrf.mxu0
    %594 = vmatprep.mubr.f32.mxu0 0.0
    %595 = vmatmul.mubr.f32.gmra.mxu0 %v439
    %v596 = vpop.f32.mrf.mxu0
    %v597 = vadd.f32 %v463, %v596
    %v598 = vpop.f32.mrf.mxu0
    %599 = vmatprep.mubr.f32.mxu0 0.0
    %600 = vmatmul.mubr.f32.gmra.mxu0 %v440
    %v601 = vpop.f32.mrf.mxu0
    %v602 = vadd.f32 %v463, %v601
    %v603 = vpop.f32.mrf.mxu0
    %604 = vmatprep.mubr.f32.mxu0 0.0
    %605 = vmatmul.mubr.f32.gmra.mxu0 %v441
    %v606 = vpop.f32.mrf.mxu0
    %v607 = vadd.f32 %v463, %v606
    %v608 = vpop.f32.mrf.mxu0
    %609 = vdwg.mxu0
    %v610 = vmax.f32 %v532, 0.0
    %v611 = vmax.f32 %v537, 0.0
    %v612 = vmax.f32 %v542, 0.0
    %v613 = vmax.f32 %v547, 0.0
    %v614 = vmax.f32 %v552, 0.0
    %v615 = vmax.f32 %v557, 0.0
    %v616 = vmax.f32 %v562, 0.0
    %v617 = vmax.f32 %v567, 0.0
    %v618 = vmax.f32 %v572, 0.0
    %v619 = vmax.f32 %v577, 0.0
    %v620 = vmax.f32 %v582, 0.0
    %v621 = vmax.f32 %v587, 0.0
    %v622 = vmax.f32 %v592, 0.0
    %v623 = vmax.f32 %v597, 0.0
    %v624 = vmax.f32 %v602, 0.0
    %v625 = vmax.f32 %v607, 0.0
    %v626 = vand.u32 2147483647, %v532
    %v627 = vand.u32 2147483647, %v537
    %v628 = vand.u32 2147483647, %v542
    %v629 = vand.u32 2147483647, %v547
    %v630 = vand.u32 2147483647, %v552
    %v631 = vand.u32 2147483647, %v557
    %v632 = vand.u32 2147483647, %v562
    %v633 = vand.u32 2147483647, %v567
    %v634 = vand.u32 2147483647, %v572
    %v635 = vand.u32 2147483647, %v577
    %v636 = vand.u32 2147483647, %v582
    %v637 = vand.u32 2147483647, %v587
    %v638 = vand.u32 2147483647, %v592
    %v639 = vand.u32 2147483647, %v597
    %v640 = vand.u32 2147483647, %v602
    %v641 = vand.u32 2147483647, %v607
    %v642 = vsub.f32 0.0, %v626
    %v643 = vsub.f32 0.0, %v627
    %v644 = vsub.f32 0.0, %v628
    %v645 = vsub.f32 0.0, %v629
    %v646 = vsub.f32 0.0, %v630
    %v647 = vsub.f32 0.0, %v631
    %v648 = vsub.f32 0.0, %v632
    %v649 = vsub.f32 0.0, %v633
    %v650 = vsub.f32 0.0, %v634
    %v651 = vsub.f32 0.0, %v635
    %v652 = vsub.f32 0.0, %v636
    %v653 = vsub.f32 0.0, %v637
    %v654 = vsub.f32 0.0, %v638
    %v655 = vsub.f32 0.0, %v639
    %v656 = vsub.f32 0.0, %v640
    %v657 = vsub.f32 0.0, %v641
    %v658 = vmul.f32 %v642, 1.442695
    %v659 = vpow.pop %v658
    %v660 = vmul.f32 %v643, 1.442695
    %v661 = vpow.pop %v660
    %v662 = vmul.f32 %v644, 1.442695
    %v663 = vpow.pop %v662
    %v664 = vmul.f32 %v645, 1.442695
    %v665 = vpow.pop %v664
    %v666 = vmul.f32 %v646, 1.442695
    %v667 = vpow.pop %v666
    %v668 = vmul.f32 %v647, 1.442695
    %v669 = vpow.pop %v668
    %v670 = vmul.f32 %v648, 1.442695
    %v671 = vpow.pop %v670
    %v672 = vmul.f32 %v649, 1.442695
    %v673 = vpow.pop %v672
    %v674 = vmul.f32 %v650, 1.442695
    %v675 = vpow.pop %v674
    %v676 = vmul.f32 %v651, 1.442695
    %v677 = vpow.pop %v676
    %v678 = vmul.f32 %v652, 1.442695
    %v679 = vpow.pop %v678
    %v680 = vmul.f32 %v653, 1.442695
    %v681 = vpow.pop %v680
    %v682 = vmul.f32 %v654, 1.442695
    %v683 = vpow.pop %v682
    %v684 = vmul.f32 %v655, 1.442695
    %v685 = vpow.pop %v684
    %v686 = vmul.f32 %v656, 1.442695
    %v687 = vpow.pop %v686
    %v688 = vmul.f32 %v657, 1.442695
    %v689 = vpow.pop %v688
    %v690 = vadd.f32 %v659, 1.0
    %v691 = vadd.f32 %v661, 1.0
    %v692 = vadd.f32 %v663, 1.0
    %v693 = vadd.f32 %v665, 1.0
    %v694 = vadd.f32 %v667, 1.0
    %v695 = vadd.f32 %v669, 1.0
    %v696 = vadd.f32 %v671, 1.0
    %v697 = vadd.f32 %v673, 1.0
    %v698 = vadd.f32 %v675, 1.0
    %v699 = vadd.f32 %v677, 1.0
    %v700 = vadd.f32 %v679, 1.0
    %v701 = vadd.f32 %v681, 1.0
    %v702 = vadd.f32 %v683, 1.0
    %v703 = vadd.f32 %v685, 1.0
    %v704 = vadd.f32 %v687, 1.0
    %v705 = vadd.f32 %v689, 1.0
    %v706 = vlog2.pop %v690
    %v707 = vmul.f32 %v706, 0.6931472
    %v708 = vlog2.pop %v691
    %v709 = vmul.f32 %v708, 0.6931472
    %v710 = vlog2.pop %v692
    %v711 = vmul.f32 %v710, 0.6931472
    %v712 = vlog2.pop %v693
    %v713 = vmul.f32 %v712, 0.6931472
    %v714 = vlog2.pop %v694
    %v715 = vmul.f32 %v714, 0.6931472
    %v716 = vlog2.pop %v695
    %v717 = vmul.f32 %v716, 0.6931472
    %v718 = vlog2.pop %v696
    %v719 = vmul.f32 %v718, 0.6931472
    %v720 = vlog2.pop %v697
    %v721 = vmul.f32 %v720, 0.6931472
    %v722 = vlog2.pop %v698
    %v723 = vmul.f32 %v722, 0.6931472
    %v724 = vlog2.pop %v699
    %v725 = vmul.f32 %v724, 0.6931472
    %v726 = vlog2.pop %v700
    %v727 = vmul.f32 %v726, 0.6931472
    %v728 = vlog2.pop %v701
    %v729 = vmul.f32 %v728, 0.6931472
    %v730 = vlog2.pop %v702
    %v731 = vmul.f32 %v730, 0.6931472
    %v732 = vlog2.pop %v703
    %v733 = vmul.f32 %v732, 0.6931472
    %v734 = vlog2.pop %v704
    %v735 = vmul.f32 %v734, 0.6931472
    %v736 = vlog2.pop %v705
    %v737 = vmul.f32 %v736, 0.6931472
    %v738 = vadd.f32 %v610, %v707
    %v739 = vadd.f32 %v611, %v709
    %v740 = vadd.f32 %v612, %v711
    %v741 = vadd.f32 %v613, %v713
    %v742 = vadd.f32 %v614, %v715
    %v743 = vadd.f32 %v615, %v717
    %v744 = vadd.f32 %v616, %v719
    %v745 = vadd.f32 %v617, %v721
    %v746 = vadd.f32 %v618, %v723
    %v747 = vadd.f32 %v619, %v725
    %v748 = vadd.f32 %v620, %v727
    %v749 = vadd.f32 %v621, %v729
    %v750 = vadd.f32 %v622, %v731
    %v751 = vadd.f32 %v623, %v733
    %v752 = vadd.f32 %v624, %v735
    %v753 = vadd.f32 %v625, %v737
    %754 = vst [vmem:[#allocation8] sm:$0xff] %v738
    %755 = vst [vmem:[#allocation8 + $0x8] sm:$0xff] %v739
    %756 = vst [vmem:[#allocation8 + $0x10] sm:$0xff] %v740
    %757 = vst [vmem:[#allocation8 + $0x18] sm:$0xff] %v741
    %758 = vst [vmem:[#allocation8 + $0x20] sm:$0xff] %v742
    %759 = vst [vmem:[#allocation8 + $0x28] sm:$0xff] %v743
    %760 = vst [vmem:[#allocation8 + $0x30] sm:$0xff] %v744
    %761 = vst [vmem:[#allocation8 + $0x38] sm:$0xff] %v745
    %762 = vst [vmem:[#allocation8 + $0x40] sm:$0xff] %v746
    %763 = vst [vmem:[#allocation8 + $0x48] sm:$0xff] %v747
    %764 = vst [vmem:[#allocation8 + $0x50] sm:$0xff] %v748
    %765 = vst [vmem:[#allocation8 + $0x58] sm:$0xff] %v749
    %766 = vst [vmem:[#allocation8 + $0x60] sm:$0xff] %v750
    %767 = vst [vmem:[#allocation8 + $0x68] sm:$0xff] %v751
    %768 = vst [vmem:[#allocation8 + $0x70] sm:$0xff] %v752
    %769 = vst [vmem:[#allocation8 + $0x78] sm:$0xff] %v753
    %v770 = vlaneseq
    %v771 = vshrl.u32 %v770, 7
    %v772 = vld [vmem:[%s99] sm:$0x1]
    %v773 = vlaneseq
    %v774 = vshrl.u32 %v773, 7
    %v775 = vsub.s32 0, %v774
    %v776 = vrot.slane %v772, %v775
    %vm777 = vcmp.eq.s32.totalorder %v771, %v776
    %v778 = vld [vmem:[%s104] sm:$0x1]
    %v780 = vlaneseq
    %v781 = vshrl.u32 %v780, 7
    %v782 = vsub.s32 0, %v781
    %v783 = vrot.slane %v778, %v782
    %v785 = vsel %vm777, %v783, 0.0
    %v786 = vld [vmem:[#allocation9] sm:$0xff]
    %787 = vmatprep.subr.mxu0 0.0
    %788 = vmatpush1.msra.mxu0 %v753
    %789 = vmatprep.subr.mxu0 0.0
    %790 = vmatpush1.msra.mxu0 %v752
    %791 = vmatprep.subr.mxu0 0.0
    %792 = vmatpush1.msra.mxu0 %v751
    %793 = vmatprep.subr.mxu0 0.0
    %794 = vmatpush1.msra.mxu0 %v750
    %795 = vmatprep.subr.mxu0 0.0
    %796 = vmatpush1.msra.mxu0 %v749
    %797 = vmatprep.subr.mxu0 0.0
    %798 = vmatpush1.msra.mxu0 %v748
    %799 = vmatprep.subr.mxu0 0.0
    %800 = vmatpush1.msra.mxu0 %v747
    %801 = vmatprep.subr.mxu0 0.0
    %802 = vmatpush1.msra.mxu0 %v746
    %803 = vmatprep.subr.mxu0 0.0
    %804 = vmatpush1.msra.mxu0 %v745
    %805 = vmatprep.subr.mxu0 0.0
    %806 = vmatpush1.msra.mxu0 %v744
    %807 = vmatprep.subr.mxu0 0.0
    %808 = vmatpush1.msra.mxu0 %v743
    %809 = vmatprep.subr.mxu0 0.0
    %810 = vmatpush1.msra.mxu0 %v742
    %811 = vmatprep.subr.mxu0 0.0
    %812 = vmatpush1.msra.mxu0 %v741
    %813 = vmatprep.subr.mxu0 0.0
    %814 = vmatpush1.msra.mxu0 %v740
    %815 = vmatprep.subr.mxu0 0.0
    %816 = vmatpush1.msra.mxu0 %v739
    %817 = vmatprep.subr.mxu0 0.0
    %818 = vmatpush1.msra.mxu0 %v738
    %819 = vmatprep.subr.mxu0 0.0
    %820 = vmatpush2.msra.mxu0 0.0
    %821 = vmatprep.subr.mxu0 0.0
    %822 = vmatpush2.msra.mxu0 0.0
    %823 = vmatprep.subr.mxu0 0.0
    %824 = vmatpush2.msra.mxu0 0.0
    %825 = vmatprep.subr.mxu0 0.0
    %826 = vmatpush2.msra.mxu0 0.0
    %827 = vmatprep.subr.mxu0 0.0
    %828 = vmatpush2.msra.mxu0 0.0
    %829 = vmatprep.subr.mxu0 0.0
    %830 = vmatpush2.msra.mxu0 0.0
    %831 = vmatprep.subr.mxu0 0.0
    %832 = vmatpush2.msra.mxu0 0.0
    %833 = vmatprep.subr.mxu0 0.0
    %834 = vmatpush2.msra.mxu0 0.0
    %835 = vmatprep.subr.mxu0 0.0
    %836 = vmatpush2.msra.mxu0 0.0
    %837 = vmatprep.subr.mxu0 0.0
    %838 = vmatpush2.msra.mxu0 0.0
    %839 = vmatprep.subr.mxu0 0.0
    %840 = vmatpush2.msra.mxu0 0.0
    %841 = vmatprep.subr.mxu0 0.0
    %842 = vmatpush2.msra.mxu0 0.0
    %843 = vmatprep.subr.mxu0 0.0
    %844 = vmatpush2.msra.mxu0 0.0
    %845 = vmatprep.subr.mxu0 0.0
    %846 = vmatpush2.msra.mxu0 0.0
    %847 = vmatprep.subr.mxu0 0.0
    %848 = vmatpush2.msra.mxu0 0.0
    %849 = vmatprep.subr.mxu0 0.0
    %850 = vmatpush2.msra.mxu0 0.0
    %851 = vmatprep.mubr.f32.mxu0 0.0
    %852 = vmatmul.mubr.f32.gmra.mxu0 %v785
    %v853 = vpop.f32.mrf.mxu0
    %v854 = vadd.f32 0.0, %v853
    %v855 = vpop.f32.mrf.mxu0
    %856 = vdwg.mxu0
    %v857 = vadd.f32 %v786, %v854
    %858 = vst [vmem:[#allocation9] sm:$0xff] %v857
    %s859 = sadd.s32 0, 0
    %s860 = smul.u32 %s859, 128
    %v861 = vadd.s32 %v771, 8
    %v862 = vadd.s32 %v771, 16
    %v863 = vadd.s32 %v771, 24
    %v864 = vadd.s32 %v771, 32
    %v865 = vadd.s32 %v771, 40
    %v866 = vadd.s32 %v771, 48
    %v867 = vadd.s32 %v771, 56
    %v868 = vadd.s32 %v771, 64
    %v869 = vadd.s32 %v771, 72
    %v870 = vadd.s32 %v771, 80
    %v871 = vadd.s32 %v771, 88
    %v872 = vadd.s32 %v771, 96
    %v873 = vadd.s32 %v771, 104
    %v874 = vadd.s32 %v771, 112
    %v875 = vadd.s32 %v771, 120
    %v876 = vstv %s860
    %v877 = vadd.s32 %v876, %v771
    %v878 = vadd.s32 %v876, %v861
    %v879 = vadd.s32 %v876, %v862
    %v880 = vadd.s32 %v876, %v863
    %v881 = vadd.s32 %v876, %v864
    %v882 = vadd.s32 %v876, %v865
    %v883 = vadd.s32 %v876, %v866
    %v884 = vadd.s32 %v876, %v867
    %v885 = vadd.s32 %v876, %v868
    %v886 = vadd.s32 %v876, %v869
    %v887 = vadd.s32 %v876, %v870
    %v888 = vadd.s32 %v876, %v871
    %v889 = vadd.s32 %v876, %v872
    %v890 = vadd.s32 %v876, %v873
    %v891 = vadd.s32 %v876, %v874
    %v892 = vadd.s32 %v876, %v875
    %vm893 = vcmp.lt.s32.totalorder %v877, 19
    %vm894 = vcmp.lt.s32.totalorder %v878, 19
    %vm895 = vcmp.lt.s32.totalorder %v879, 19
    %vm896 = vcmp.lt.s32.totalorder %v880, 19
    %vm897 = vcmp.lt.s32.totalorder %v881, 19
    %vm898 = vcmp.lt.s32.totalorder %v882, 19
    %vm899 = vcmp.lt.s32.totalorder %v883, 19
    %vm900 = vcmp.lt.s32.totalorder %v884, 19
    %vm901 = vcmp.lt.s32.totalorder %v885, 19
    %vm902 = vcmp.lt.s32.totalorder %v886, 19
    %vm903 = vcmp.lt.s32.totalorder %v887, 19
    %vm904 = vcmp.lt.s32.totalorder %v888, 19
    %vm905 = vcmp.lt.s32.totalorder %v889, 19
    %vm906 = vcmp.lt.s32.totalorder %v890, 19
    %vm907 = vcmp.lt.s32.totalorder %v891, 19
    %vm908 = vcmp.lt.s32.totalorder %v892, 19
    %v909 = vsel %vm893, 1, 0
    %v910 = vsel %vm894, 1, 0
    %v911 = vsel %vm895, 1, 0
    %v912 = vsel %vm896, 1, 0
    %v913 = vsel %vm897, 1, 0
    %v914 = vsel %vm898, 1, 0
    %v915 = vsel %vm899, 1, 0
    %v916 = vsel %vm900, 1, 0
    %v917 = vsel %vm901, 1, 0
    %v918 = vsel %vm902, 1, 0
    %v919 = vsel %vm903, 1, 0
    %v920 = vsel %vm904, 1, 0
    %v921 = vsel %vm905, 1, 0
    %v922 = vsel %vm906, 1, 0
    %v923 = vsel %vm907, 1, 0
    %v924 = vsel %vm908, 1, 0
    %v925 = vcvt.s32.f32 %v909
    %v926 = vcvt.s32.f32 %v910
    %v927 = vcvt.s32.f32 %v911
    %v928 = vcvt.s32.f32 %v912
    %v929 = vcvt.s32.f32 %v913
    %v930 = vcvt.s32.f32 %v914
    %v931 = vcvt.s32.f32 %v915
    %v932 = vcvt.s32.f32 %v916
    %v933 = vcvt.s32.f32 %v917
    %v934 = vcvt.s32.f32 %v918
    %v935 = vcvt.s32.f32 %v919
    %v936 = vcvt.s32.f32 %v920
    %v937 = vcvt.s32.f32 %v921
    %v938 = vcvt.s32.f32 %v922
    %v939 = vcvt.s32.f32 %v923
    %v940 = vcvt.s32.f32 %v924
    %v941 = vld [vmem:[#allocation11] sm:$0x1]
    %v942 = vmul.f32 %v738, %v925
    %v943 = vmul.f32 %v739, %v926
    %v944 = vmul.f32 %v740, %v927
    %v945 = vmul.f32 %v741, %v928
    %v946 = vmul.f32 %v742, %v929
    %v947 = vmul.f32 %v743, %v930
    %v948 = vmul.f32 %v744, %v931
    %v949 = vmul.f32 %v745, %v932
    %v950 = vmul.f32 %v746, %v933
    %v951 = vmul.f32 %v747, %v934
    %v952 = vmul.f32 %v748, %v935
    %v953 = vmul.f32 %v749, %v936
    %v954 = vmul.f32 %v750, %v937
    %v955 = vmul.f32 %v751, %v938
    %v956 = vmul.f32 %v752, %v939
    %v957 = vmul.f32 %v753, %v940
    %v958 = vadd.f32 %v942, %v943
    %v959 = vadd.f32 %v958, %v944
    %v960 = vadd.f32 %v959, %v945
    %v961 = vadd.f32 %v960, %v946
    %v962 = vadd.f32 %v961, %v947
    %v963 = vadd.f32 %v962, %v948
    %v964 = vadd.f32 %v963, %v949
    %v965 = vadd.f32 %v964, %v950
    %v966 = vadd.f32 %v965, %v951
    %v967 = vadd.f32 %v966, %v952
    %v968 = vadd.f32 %v967, %v953
    %v969 = vadd.f32 %v968, %v954
    %v970 = vadd.f32 %v969, %v955
    %v971 = vadd.f32 %v970, %v956
    %v972 = vadd.f32 %v971, %v957
    %v973 = vrot.slane %v972, 4
    %v974 = vadd.f32 %v972, %v973
    %v975 = vrot.slane %v974, 2
    %v976 = vadd.f32 %v974, %v975
    %v977 = vrot.slane %v976, 1
    %v978 = vadd.f32 %v976, %v977
    %v979 = vadd.f32 %v941, %v978
    %980 = vst [vmem:[#allocation11] sm:$0x1] %v979
    // Predicated region
    $region46: #{tpu_custom_call.1} parent=1 // pred_check
      _
    $region47: #{tpu_custom_call.1} parent=1 // pred_check_branch
      %982 = sbr.rel (0) target = $region49
    $region48: #{tpu_custom_call.1} parent=1 // pred_region
      %s983 = sadd.s32 0, 0
      %s984 = smul.u32 16, %s983
      %s986 = ssub.s32 2048, 2048
      %987 = vsyncadd [#allocation4], %s986
      %s988 = smul.addr %s984, 128
      %s989 = scalar_lea.hbm %s7, %s988
      %s990 = sshll.u32 [#allocation8], 4
      %s991 = int_to_ptr.vmem [resolvable:$true] %s990
      %996 = dma.vmem_to_hbm [thread:$0]  %s991, 2048, %s989, [#allocation4], 128, 128, 8
    $region49: #{tpu_custom_call.1} parent=1 // pred_fallthru
      _
    // Predicated region
    $region50: #{tpu_custom_call.1} parent=1 // pred_check
      _
    $region51: #{tpu_custom_call.1} parent=1 // pred_check_branch
      %998 = sbr.rel (0) target = $region53
    $region52: #{tpu_custom_call.1} parent=1 // pred_region
      %s1000 = ssub.s32 128, 128
      %1001 = vsyncadd [#allocation10], %s1000
      %s1003 = sshll.u32 [#allocation9], 4
      %s1004 = int_to_ptr.vmem [resolvable:$true] %s1003
      %1006 = dma.vmem_to_hbm [thread:$0]  %s1004, 128, %s8, [#allocation10]
    $region53: #{tpu_custom_call.1} parent=1 // pred_fallthru
      _
    // Predicated region
    $region54: #{tpu_custom_call.1} parent=1 // pred_check
      _
    $region55: #{tpu_custom_call.1} parent=1 // pred_check_branch
      %1008 = sbr.rel (0) target = $region57
    $region56: #{tpu_custom_call.1} parent=1 // pred_region
      %s1010 = ssub.s32 16, 16
      %1011 = vsyncadd [#allocation10], %s1010
      %s1013 = sshll.u32 [#allocation11], 4
      %s1014 = int_to_ptr.vmem [resolvable:$true] %s1013
      %1016 = dma.vmem_to_hbm [thread:$0]  %s1014, 16, %s9, [#allocation10]
    $region57: #{tpu_custom_call.1} parent=1 // pred_fallthru
      _
    // Predicated region
    $region58: #{tpu_custom_call.1} parent=1 // pred_check
      _
    $region59: #{tpu_custom_call.1} parent=1 // pred_check_branch
      %1018 = sbr.rel (0) target = $region61
    $region60: #{tpu_custom_call.1} parent=1 // pred_region
      %1019 = dma.done [#allocation4], 2048
    $region61: #{tpu_custom_call.1} parent=1 // pred_fallthru
      _
    // Predicated region
    $region62: #{tpu_custom_call.1} parent=1 // pred_check
      _
    $region63: #{tpu_custom_call.1} parent=1 // pred_check_branch
      %1021 = sbr.rel (0) target = $region65
    $region64: #{tpu_custom_call.1} parent=1 // pred_region
      %1022 = dma.done [#allocation10], 128
    $region65: #{tpu_custom_call.1} parent=1 // pred_fallthru
      _
    // Predicated region
    $region66: #{tpu_custom_call.1} parent=1 // pred_check
      _
    $region67: #{tpu_custom_call.1} parent=1 // pred_check_branch
      %1024 = sbr.rel (0) target = $region69
    $region68: #{tpu_custom_call.1} parent=1 // pred_region
      %1025 = dma.done [#allocation10], 16
    $region69: #{tpu_custom_call.1} parent=1 // pred_fallthru
      _
    %1026 = vsyncpa [#allocation3], 1
    %1027 = vsyncpa [#allocation6], 1
    %1028 = vsyncpa [#allocation4], 1
    %1029 = vsyncpa [#allocation10], 1

</llo_original>
